<compile_context>
chip_gen: v7x
topology: tpu7x:2x2x1
jax: 0.10.0
libtpu: 0.0.40
codegen_flags: <defaults>
</compile_context>

<pallas_src>
import functools

import jax
import jax.numpy as jnp
from jax.experimental import pallas as pl
from jax.experimental.pallas import tpu as pltpu

D_IN, H1, H2, D_OUT = 72, 512, 128, 14
D_IN_PAD = 128           # lane-dense padded input width  (multiple of 128)
D_OUT_PAD = 128          # lane-dense padded logits width (multiple of 128)
NEG_INF_BIAS = -1e30     # pad-column bias so log_softmax ignores pad columns


def mlp_kernel(x_ref, w1_ref, b1_ref, w2_ref, b2_ref, w3_ref, b3_ref, o_ref):
    # x / weights arrive as bf16 (cast in the wrapper); accumulate in f32 on the MXU.
    x = x_ref[...]

    # fc1 + relu (f32 accumulation, f32 elementwise)
    h = jnp.dot(x, w1_ref[...], preferred_element_type=jnp.float32) + b1_ref[...]
    h = jnp.maximum(h, 0.0)

    # fc2 + relu
    h = jnp.dot(h.astype(jnp.bfloat16), w2_ref[...],
                preferred_element_type=jnp.float32) + b2_ref[...]
    h = jnp.maximum(h, 0.0)

    # dropout(p=0.25): identity in eval mode (PyTorch .eval() semantics).
    # TODO(synk): training-mode dropout would use pltpu.prng_seed / prng_random_bits.

    # fc3 (padded to 128 lanes; pad columns carry a -1e30 bias)
    logits = jnp.dot(h.astype(jnp.bfloat16), w3_ref[...],
                     preferred_element_type=jnp.float32) + b3_ref[...]

    # log_softmax over the feature axis; pad columns contribute exp(~-inf) == 0.
    m = jnp.max(logits, axis=-1, keepdims=True)
    shifted = logits - m
    lse = jnp.log(jnp.sum(jnp.exp(shifted), axis=-1, keepdims=True))
    o_ref[...] = (shifted - lse).astype(o_ref.dtype)


def _prep_params(params):
    """bf16 matmul operands; pad fc1 input rows and fc3 output cols to 128 lanes."""
    w1, b1, w2, b2, w3, b3 = params
    w1p = jnp.zeros((D_IN_PAD, H1), jnp.float32).at[:D_IN].set(w1)
    w3p = jnp.zeros((H2, D_OUT_PAD), jnp.float32).at[:, :D_OUT].set(w3)
    b3p = jnp.full((1, D_OUT_PAD), NEG_INF_BIAS, jnp.float32).at[:, :D_OUT].set(b3)
    return (w1p.astype(jnp.bfloat16), b1.astype(jnp.float32),
            w2.astype(jnp.bfloat16), b2.astype(jnp.float32),
            w3p.astype(jnp.bfloat16), b3p)


@functools.partial(jax.jit, static_argnames=("tb",))
def mlp_forward(x, params, *, tb=1024):
    w1p, b1, w2, b2, w3p, b3p = _prep_params(params)
    B = x.shape[0]

    # Batch tile: round small batches up to a sublane multiple, cap at `tb`.
    TB = min(tb, max(8, ((B + 7) // 8) * 8))
    n_tiles = pl.cdiv(B, TB)
    B_pad = n_tiles * TB
    x_p = jnp.zeros((B_pad, D_IN_PAD), jnp.bfloat16).at[:B, :D_IN].set(
        x.astype(jnp.bfloat16))

    resident = lambda shape: pl.BlockSpec(shape, lambda i: (0, 0))

    out = pl.pallas_call(
        mlp_kernel,
        out_shape=jax.ShapeDtypeStruct((B_pad, D_OUT_PAD), jnp.float32),
        grid_spec=pltpu.PrefetchScalarGridSpec(
            num_scalar_prefetch=0,
            grid=(n_tiles,),
            in_specs=[
                pl.BlockSpec((TB, D_IN_PAD), lambda i: (i, 0)),  # x: tiled over batch
                resident((D_IN_PAD, H1)), resident((1, H1)),     # fc1 (VMEM-resident)
                resident((H1, H2)), resident((1, H2)),           # fc2
                resident((H2, D_OUT_PAD)), resident((1, D_OUT_PAD)),  # fc3 (padded)
            ],
            out_specs=pl.BlockSpec((TB, D_OUT_PAD), lambda i: (i, 0)),
        ),
        compiler_params=pltpu.CompilerParams(
            dimension_semantics=("parallel",),   # shard batch tiles across TCs on v7x
        ),
    )(x_p, w1p, b1, w2, b2, w3p, b3p)
    return out[:B, :D_OUT]


def init_params(key):
    # Deterministic init matching PyTorch Linear shapes; stored transposed (in, out).
    k1, k2, k3, k4, k5, k6 = jax.random.split(key, 6)

    def linear(kw, kb, fan_in, fan_out):
        bound = 1.0 / jnp.sqrt(fan_in)
        w = jax.random.uniform(kw, (fan_in, fan_out), jnp.float32, -bound, bound)
        b = jax.random.uniform(kb, (1, fan_out), jnp.float32, -bound, bound)
        return w, b

    w1, b1 = linear(k1, k2, D_IN, H1)
    w2, b2 = linear(k3, k4, H1, H2)
    w3, b3 = linear(k5, k6, H2, D_OUT)
    return (w1, b1, w2, b2, w3, b3)


def mlp_reference_f32(x, params):
    w1, b1, w2, b2, w3, b3 = params
    h = jnp.maximum(x @ w1 + b1, 0.0)
    h = jnp.maximum(h @ w2 + b2, 0.0)
    logits = h @ w3 + b3
    return jax.nn.log_softmax(logits, axis=1)


def mlp_reference_bf16(x, params):
    # Numerics matched to the kernel: bf16 matmul operands, f32 accumulation.
    w1, b1, w2, b2, w3, b3 = params
    bf = jnp.bfloat16
    dot = lambda a, b: jnp.dot(a.astype(bf), b.astype(bf),
                               preferred_element_type=jnp.float32)
    h = jnp.maximum(dot(x, w1) + b1, 0.0)
    h = jnp.maximum(dot(h, w2) + b2, 0.0)
    logits = dot(h, w3) + b3
    return jax.nn.log_softmax(logits, axis=1)


if __name__ == "__main__":
    key = jax.random.PRNGKey(0)
    kx, kp, kx2 = jax.random.split(key, 3)
    params = init_params(kp)

    # Small-batch check (consistent with the module: features = 72).
    B = 8
    x = jax.random.normal(kx, (B, D_IN), jnp.float32)
    out = mlp_forward(x, params)
    jax.block_until_ready(out)
    assert out.shape == (B, D_OUT)
    assert jnp.allclose(out, mlp_reference_bf16(x, params), atol=2e-3, rtol=2e-3)
    assert jnp.allclose(out, mlp_reference_f32(x, params), atol=5e-2, rtol=5e-2)

    # Multi-tile check: tb=128 forces 3 batch tiles, last one padded.
    B2 = 300
    x2 = jax.random.normal(kx2, (B2, D_IN), jnp.float32)
    out2 = mlp_forward(x2, params, tb=128)
    jax.block_until_ready(out2)
    assert out2.shape == (B2, D_OUT)
    assert jnp.allclose(out2, mlp_reference_bf16(x2, params), atol=2e-3, rtol=2e-3)
    assert jnp.allclose(out2, mlp_reference_f32(x2, params), atol=5e-2, rtol=5e-2)

    print("KERNEL_OK")
</pallas_src>

<mosaic_0001>
module attributes {stable_mosaic.version = 11 : i64} {
  func.func @mlp_kernel(%arg0: i32, %arg1: memref<8x128xbf16, #tpu.memory_space<vmem>>, %arg2: memref<128x512xbf16, #tpu.memory_space<vmem>>, %arg3: memref<1x512xf32, #tpu.memory_space<vmem>>, %arg4: memref<512x128xbf16, #tpu.memory_space<vmem>>, %arg5: memref<1x128xf32, #tpu.memory_space<vmem>>, %arg6: memref<128x128xbf16, #tpu.memory_space<vmem>>, %arg7: memref<1x128xf32, #tpu.memory_space<vmem>>, %arg8: memref<8x128xf32, #tpu.memory_space<vmem>>) attributes {dimension_semantics = [#tpu.dimension_semantics<parallel>], iteration_bounds = array<i64: 1>, scalar_prefetch = 0 : i64, scratch_operands = 0 : i64, tpu.core_type = #tpu.core_type<tc>, window_params = [{transform_indices = @transform_0, window_bounds = array<i64: 8, 128>}, {pipeline_mode = #tpu.pipeline_mode<synchronous>, transform_indices = @transform_1, window_bounds = array<i64: 128, 512>}, {pipeline_mode = #tpu.pipeline_mode<synchronous>, transform_indices = @transform_2, window_bounds = array<i64: 1, 512>}, {pipeline_mode = #tpu.pipeline_mode<synchronous>, transform_indices = @transform_3, window_bounds = array<i64: 512, 128>}, {pipeline_mode = #tpu.pipeline_mode<synchronous>, transform_indices = @transform_4, window_bounds = array<i64: 1, 128>}, {pipeline_mode = #tpu.pipeline_mode<synchronous>, transform_indices = @transform_5, window_bounds = array<i64: 128, 128>}, {pipeline_mode = #tpu.pipeline_mode<synchronous>, transform_indices = @transform_6, window_bounds = array<i64: 1, 128>}, {transform_indices = @transform_7, window_bounds = array<i64: 8, 128>}]} {
    %c0 = arith.constant 0 : index
    %c0_0 = arith.constant 0 : index
    %0 = vector.load %arg1[%c0, %c0_0] : memref<8x128xbf16, #tpu.memory_space<vmem>>, vector<8x128xbf16>
    %c0_1 = arith.constant 0 : index
    %c0_2 = arith.constant 0 : index
    %1 = vector.load %arg2[%c0_1, %c0_2] : memref<128x512xbf16, #tpu.memory_space<vmem>>, vector<128x512xbf16>
    %cst = arith.constant dense<0.000000e+00> : vector<8x512xf32>
    %2 = tpu.matmul %0, %1, %cst {dimension_numbers = #tpu.dot_dimension_numbers<[1], [0], [0], [1], [0, 0, 1, 1], [], []>} : vector<8x128xbf16>, vector<128x512xbf16>, vector<8x512xf32> -> vector<8x512xf32>
    %c0_3 = arith.constant 0 : index
    %c0_4 = arith.constant 0 : index
    %3 = vector.load %arg3[%c0_3, %c0_4] : memref<1x512xf32, #tpu.memory_space<vmem>>, vector<1x512xf32>
    %4 = vector.broadcast %3 : vector<1x512xf32> to vector<8x512xf32>
    %5 = arith.addf %2, %4 : vector<8x512xf32>
    %cst_5 = arith.constant 0.000000e+00 : f32
    %6 = vector.broadcast %cst_5 : f32 to vector<8x512xf32>
    %7 = arith.maximumf %5, %6 : vector<8x512xf32>
    %8 = arith.truncf %7 : vector<8x512xf32> to vector<8x512xbf16>
    %c0_6 = arith.constant 0 : index
    %c0_7 = arith.constant 0 : index
    %9 = vector.load %arg4[%c0_6, %c0_7] : memref<512x128xbf16, #tpu.memory_space<vmem>>, vector<512x128xbf16>
    %cst_8 = arith.constant dense<0.000000e+00> : vector<8x128xf32>
    %10 = tpu.matmul %8, %9, %cst_8 {dimension_numbers = #tpu.dot_dimension_numbers<[1], [0], [0], [1], [0, 0, 1, 1], [], []>} : vector<8x512xbf16>, vector<512x128xbf16>, vector<8x128xf32> -> vector<8x128xf32>
    %c0_9 = arith.constant 0 : index
    %c0_10 = arith.constant 0 : index
    %11 = vector.load %arg5[%c0_9, %c0_10] : memref<1x128xf32, #tpu.memory_space<vmem>>, vector<1x128xf32>
    %12 = vector.broadcast %11 : vector<1x128xf32> to vector<8x128xf32>
    %13 = arith.addf %10, %12 : vector<8x128xf32>
    %cst_11 = arith.constant 0.000000e+00 : f32
    %14 = vector.broadcast %cst_11 : f32 to vector<8x128xf32>
    %15 = arith.maximumf %13, %14 : vector<8x128xf32>
    %16 = arith.truncf %15 : vector<8x128xf32> to vector<8x128xbf16>
    %c0_12 = arith.constant 0 : index
    %c0_13 = arith.constant 0 : index
    %17 = vector.load %arg6[%c0_12, %c0_13] : memref<128x128xbf16, #tpu.memory_space<vmem>>, vector<128x128xbf16>
    %cst_14 = arith.constant dense<0.000000e+00> : vector<8x128xf32>
    %18 = tpu.matmul %16, %17, %cst_14 {dimension_numbers = #tpu.dot_dimension_numbers<[1], [0], [0], [1], [0, 0, 1, 1], [], []>} : vector<8x128xbf16>, vector<128x128xbf16>, vector<8x128xf32> -> vector<8x128xf32>
    %c0_15 = arith.constant 0 : index
    %c0_16 = arith.constant 0 : index
    %19 = vector.load %arg7[%c0_15, %c0_16] : memref<1x128xf32, #tpu.memory_space<vmem>>, vector<1x128xf32>
    %20 = vector.broadcast %19 : vector<1x128xf32> to vector<8x128xf32>
    %21 = arith.addf %18, %20 : vector<8x128xf32>
    %cst_17 = arith.constant dense<0xFF800000> : vector<8xf32>
    %22 = vector.multi_reduction <maximumf>, %21, %cst_17 [1] : vector<8x128xf32> to vector<8xf32>
    %23 = vector.shape_cast %22 : vector<8xf32> to vector<8x1xf32>
    %24 = vector.broadcast %23 : vector<8x1xf32> to vector<8x128xf32>
    %25 = arith.subf %21, %24 : vector<8x128xf32>
    %26 = math.exp %25 : vector<8x128xf32>
    %cst_18 = arith.constant dense<0.000000e+00> : vector<8xf32>
    %27 = vector.multi_reduction <add>, %26, %cst_18 [1] : vector<8x128xf32> to vector<8xf32>
    %28 = vector.shape_cast %27 : vector<8xf32> to vector<8x1xf32>
    %29 = math.log %28 : vector<8x1xf32>
    %30 = vector.broadcast %29 : vector<8x1xf32> to vector<8x128xf32>
    %31 = arith.subf %25, %30 : vector<8x128xf32>
    %c0_19 = arith.constant 0 : index
    %c0_20 = arith.constant 0 : index
    %32 = vector.load %arg8[%c0_19, %c0_20] : memref<8x128xf32, #tpu.memory_space<vmem>>, vector<8x128xf32>
    tpu.vector_store %arg8[%c0_19, %c0_20], %31 {strides = array<i32>} : memref<8x128xf32, #tpu.memory_space<vmem>>, vector<8x128xf32>,
    return
  }
  func.func @transform_0(%arg0: i32) -> (i32, i32) {
    %c0_i32 = arith.constant 0 : i32
    %c0_i32_0 = arith.constant 0 : i32
    return %arg0, %c0_i32 : i32, i32
  }
  func.func @transform_1(%arg0: i32) -> (i32, i32) {
    %c0_i32 = arith.constant 0 : i32
    %c0_i32_0 = arith.constant 0 : i32
    %c0_i32_1 = arith.constant 0 : i32
    return %c0_i32, %c0_i32_0 : i32, i32
  }
  func.func @transform_2(%arg0: i32) -> (i32, i32) {
    %c0_i32 = arith.constant 0 : i32
    %c0_i32_0 = arith.constant 0 : i32
    %c0_i32_1 = arith.constant 0 : i32
    return %c0_i32, %c0_i32_0 : i32, i32
  }
  func.func @transform_3(%arg0: i32) -> (i32, i32) {
    %c0_i32 = arith.constant 0 : i32
    %c0_i32_0 = arith.constant 0 : i32
    %c0_i32_1 = arith.constant 0 : i32
    return %c0_i32, %c0_i32_0 : i32, i32
  }
  func.func @transform_4(%arg0: i32) -> (i32, i32) {
    %c0_i32 = arith.constant 0 : i32
    %c0_i32_0 = arith.constant 0 : i32
    %c0_i32_1 = arith.constant 0 : i32
    return %c0_i32, %c0_i32_0 : i32, i32
  }
  func.func @transform_5(%arg0: i32) -> (i32, i32) {
    %c0_i32 = arith.constant 0 : i32
    %c0_i32_0 = arith.constant 0 : i32
    %c0_i32_1 = arith.constant 0 : i32
    return %c0_i32, %c0_i32_0 : i32, i32
  }
  func.func @transform_6(%arg0: i32) -> (i32, i32) {
    %c0_i32 = arith.constant 0 : i32
    %c0_i32_0 = arith.constant 0 : i32
    %c0_i32_1 = arith.constant 0 : i32
    return %c0_i32, %c0_i32_0 : i32, i32
  }
  func.func @transform_7(%arg0: i32) -> (i32, i32) {
    %c0_i32 = arith.constant 0 : i32
    %c0_i32_0 = arith.constant 0 : i32
    return %arg0, %c0_i32 : i32, i32
  }
}

</mosaic_0001>

<llo_original>
// kernel: mlp_forward.1
$region0: #{mlp_forward.1}
  #allocation0 [shape = 'u32[]', space=smem, size = 0x4, offset = 0x4, fixed_abs, tag = 'smem constant byte address 0x4 - core index']
  #allocation1 [shape = 'u32[144,128]{1,0:T(1,128)}', space=vmem, size = 0x12000, scoped, tag = 'internal scratch']
  %s0 = inlined_call_operand.vmem [shape: bf16[8,128], index: 0, kind: input, shape index: {}]
  %s1 = inlined_call_operand.vmem [shape: bf16[128,512], index: 1, kind: input, shape index: {}]
  %s2 = inlined_call_operand.vmem [shape: f32[1,512], index: 2, kind: input, shape index: {}]
  %s3 = inlined_call_operand.vmem [shape: bf16[512,128], index: 3, kind: input, shape index: {}]
  %s4 = inlined_call_operand.vmem [shape: f32[1,128], index: 4, kind: input, shape index: {}]
  %s5 = inlined_call_operand.vmem [shape: bf16[128,128], index: 5, kind: input, shape index: {}]
  %s6 = inlined_call_operand.vmem [shape: f32[1,128], index: 6, kind: input, shape index: {}]
  %s7 = inlined_call_operand.hbm [shape: f32[8,128], index: 7, kind: output, shape index: {}]
  %s8 = sld [smem:[#allocation0]]
  $region38: #{mlp_forward.1} parent=0
    _
  %s10 = ssub.s32 1, %s8
  %s11 = scalar_select 0, %s10, %s8
  $region1: #{mlp_forward.1} parent=0
    #allocation2 [shape = 'u8[4096]{0}', space=vmem, size = 0x1000, scoped, tag = 'output window, operand 0, single buffered']
    #allocation3 [shape = 's32[1]{0}', space=sflag, size = 0x4, scoped, tag = 'scoped memory for mlp_forward.1']
    %12 = vsyncpa [#allocation3], 0
    // Predicated region
    $region2: #{mlp_forward.1} parent=1 // pred_check
      _
    $region3: #{mlp_forward.1} parent=1 // pred_check_branch
      %14 = sbr.rel (0) target = $region5
    $region4: #{mlp_forward.1} parent=1 // pred_region
      _
    $region5: #{mlp_forward.1} parent=1 // pred_fallthru
      _
    // Predicated region
    $region6: #{mlp_forward.1} parent=1 // pred_check
      _
    $region7: #{mlp_forward.1} parent=1 // pred_check_branch
      %16 = sbr.rel (0) target = $region9
    $region8: #{mlp_forward.1} parent=1 // pred_region
      _
    $region9: #{mlp_forward.1} parent=1 // pred_fallthru
      _
    // Predicated region
    $region10: #{mlp_forward.1} parent=1 // pred_check
      _
    $region11: #{mlp_forward.1} parent=1 // pred_check_branch
      %18 = sbr.rel (0) target = $region13
    $region12: #{mlp_forward.1} parent=1 // pred_region
      _
    $region13: #{mlp_forward.1} parent=1 // pred_fallthru
      _
    // Predicated region
    $region14: #{mlp_forward.1} parent=1 // pred_check
      _
    $region15: #{mlp_forward.1} parent=1 // pred_check_branch
      %20 = sbr.rel (0) target = $region17
    $region16: #{mlp_forward.1} parent=1 // pred_region
      _
    $region17: #{mlp_forward.1} parent=1 // pred_fallthru
      _
    // Predicated region
    $region18: #{mlp_forward.1} parent=1 // pred_check
      _
    $region19: #{mlp_forward.1} parent=1 // pred_check_branch
      %22 = sbr.rel (0) target = $region21
    $region20: #{mlp_forward.1} parent=1 // pred_region
      _
    $region21: #{mlp_forward.1} parent=1 // pred_fallthru
      _
    // Predicated region
    $region22: #{mlp_forward.1} parent=1 // pred_check
      _
    $region23: #{mlp_forward.1} parent=1 // pred_check_branch
      %24 = sbr.rel (0) target = $region25
    $region24: #{mlp_forward.1} parent=1 // pred_region
      _
    $region25: #{mlp_forward.1} parent=1 // pred_fallthru
      _
    // Predicated region
    $region26: #{mlp_forward.1} parent=1 // pred_check
      _
    $region27: #{mlp_forward.1} parent=1 // pred_check_branch
      %26 = sbr.rel (0) target = $region29
    $region28: #{mlp_forward.1} parent=1 // pred_region
      _
    $region29: #{mlp_forward.1} parent=1 // pred_fallthru
      _
    %v28 = vld [vmem:[%s0] sm:$0xf]
    %v29 = vld [vmem:[%s1] sm:$0xff]
    %v30 = vld [vmem:[%s1 + $0x8] sm:$0xff]
    %v31 = vld [vmem:[%s1 + $0x10] sm:$0xff]
    %v32 = vld [vmem:[%s1 + $0x18] sm:$0xff]
    %v33 = vld [vmem:[%s1 + $0x20] sm:$0xff]
    %v34 = vld [vmem:[%s1 + $0x28] sm:$0xff]
    %v35 = vld [vmem:[%s1 + $0x30] sm:$0xff]
    %v36 = vld [vmem:[%s1 + $0x38] sm:$0xff]
    %v37 = vld [vmem:[%s1 + $0x40] sm:$0xff]
    %v38 = vld [vmem:[%s1 + $0x48] sm:$0xff]
    %v39 = vld [vmem:[%s1 + $0x50] sm:$0xff]
    %v40 = vld [vmem:[%s1 + $0x58] sm:$0xff]
    %v41 = vld [vmem:[%s1 + $0x60] sm:$0xff]
    %v42 = vld [vmem:[%s1 + $0x68] sm:$0xff]
    %v43 = vld [vmem:[%s1 + $0x70] sm:$0xff]
    %v44 = vld [vmem:[%s1 + $0x78] sm:$0xff]
    %v45 = vld [vmem:[%s1 + $0x80] sm:$0xff]
    %v46 = vld [vmem:[%s1 + $0x88] sm:$0xff]
    %v47 = vld [vmem:[%s1 + $0x90] sm:$0xff]
    %v48 = vld [vmem:[%s1 + $0x98] sm:$0xff]
    %v49 = vld [vmem:[%s1 + $0xa0] sm:$0xff]
    %v50 = vld [vmem:[%s1 + $0xa8] sm:$0xff]
    %v51 = vld [vmem:[%s1 + $0xb0] sm:$0xff]
    %v52 = vld [vmem:[%s1 + $0xb8] sm:$0xff]
    %v53 = vld [vmem:[%s1 + $0xc0] sm:$0xff]
    %v54 = vld [vmem:[%s1 + $0xc8] sm:$0xff]
    %v55 = vld [vmem:[%s1 + $0xd0] sm:$0xff]
    %v56 = vld [vmem:[%s1 + $0xd8] sm:$0xff]
    %v57 = vld [vmem:[%s1 + $0xe0] sm:$0xff]
    %v58 = vld [vmem:[%s1 + $0xe8] sm:$0xff]
    %v59 = vld [vmem:[%s1 + $0xf0] sm:$0xff]
    %v60 = vld [vmem:[%s1 + $0xf8] sm:$0xff]
    %v61 = vld [vmem:[%s2] sm:$0xf]
    %v63 = vlaneseq
    %v64 = vshrl.u32 %v63, 7
    %v65 = vsub.s32 0, %v64
    %v66 = vrot.slane %v61, %v65
    %v67 = vlaneseq
    %v68 = vshrl.u32 %v67, 7
    %v69 = vsub.s32 1, %v68
    %v70 = vrot.slane %v61, %v69
    %v71 = vlaneseq
    %v72 = vshrl.u32 %v71, 7
    %v73 = vsub.s32 2, %v72
    %v74 = vrot.slane %v61, %v73
    %v75 = vlaneseq
    %v76 = vshrl.u32 %v75, 7
    %v77 = vsub.s32 3, %v76
    %v78 = vrot.slane %v61, %v77
    %v115 = vunpack.c.l.b16 %v29
    %v116 = vunpack.c.h.b16 %v29
    %v117 = vunpack.c.l.b16 %v30
    %v118 = vunpack.c.h.b16 %v30
    %v119 = vunpack.c.l.b16 %v31
    %v120 = vunpack.c.h.b16 %v31
    %v121 = vunpack.c.l.b16 %v32
    %v122 = vunpack.c.h.b16 %v32
    %v123 = vunpack.c.l.b16 %v33
    %v124 = vunpack.c.h.b16 %v33
    %v125 = vunpack.c.l.b16 %v34
    %v126 = vunpack.c.h.b16 %v34
    %v127 = vunpack.c.l.b16 %v35
    %v128 = vunpack.c.h.b16 %v35
    %v129 = vunpack.c.l.b16 %v36
    %v130 = vunpack.c.h.b16 %v36
    %v131 = vunpack.c.l.b16 %v37
    %v132 = vunpack.c.h.b16 %v37
    %v133 = vunpack.c.l.b16 %v38
    %v134 = vunpack.c.h.b16 %v38
    %v135 = vunpack.c.l.b16 %v39
    %v136 = vunpack.c.h.b16 %v39
    %v137 = vunpack.c.l.b16 %v40
    %v138 = vunpack.c.h.b16 %v40
    %v139 = vunpack.c.l.b16 %v41
    %v140 = vunpack.c.h.b16 %v41
    %v141 = vunpack.c.l.b16 %v42
    %v142 = vunpack.c.h.b16 %v42
    %v143 = vunpack.c.l.b16 %v43
    %v144 = vunpack.c.h.b16 %v43
    %v145 = vunpack.c.l.b16 %v44
    %v146 = vunpack.c.h.b16 %v44
    %v147 = vunpack.c.l.b16 %v45
    %v148 = vunpack.c.h.b16 %v45
    %v149 = vunpack.c.l.b16 %v46
    %v150 = vunpack.c.h.b16 %v46
    %v151 = vunpack.c.l.b16 %v47
    %v152 = vunpack.c.h.b16 %v47
    %v153 = vunpack.c.l.b16 %v48
    %v154 = vunpack.c.h.b16 %v48
    %v155 = vunpack.c.l.b16 %v49
    %v156 = vunpack.c.h.b16 %v49
    %v157 = vunpack.c.l.b16 %v50
    %v158 = vunpack.c.h.b16 %v50
    %v159 = vunpack.c.l.b16 %v51
    %v160 = vunpack.c.h.b16 %v51
    %v161 = vunpack.c.l.b16 %v52
    %v162 = vunpack.c.h.b16 %v52
    %v163 = vunpack.c.l.b16 %v53
    %v164 = vunpack.c.h.b16 %v53
    %v165 = vunpack.c.l.b16 %v54
    %v166 = vunpack.c.h.b16 %v54
    %v167 = vunpack.c.l.b16 %v55
    %v168 = vunpack.c.h.b16 %v55
    %v169 = vunpack.c.l.b16 %v56
    %v170 = vunpack.c.h.b16 %v56
    %v171 = vunpack.c.l.b16 %v57
    %v172 = vunpack.c.h.b16 %v57
    %v173 = vunpack.c.l.b16 %v58
    %v174 = vunpack.c.h.b16 %v58
    %v175 = vunpack.c.l.b16 %v59
    %v176 = vunpack.c.h.b16 %v59
    %v177 = vunpack.c.l.b16 %v60
    %v178 = vunpack.c.h.b16 %v60
    %v179 = vpack.c.b16 %v119, %v115
    %v180 = vpack.c.b16 %v120, %v116
    %v181 = vpack.c.b16 %v121, %v117
    %v182 = vpack.c.b16 %v122, %v118
    %v183 = vpack.c.b16 %v127, %v123
    %v184 = vpack.c.b16 %v128, %v124
    %v185 = vpack.c.b16 %v129, %v125
    %v186 = vpack.c.b16 %v130, %v126
    %v187 = vpack.c.b16 %v135, %v131
    %v188 = vpack.c.b16 %v136, %v132
    %v189 = vpack.c.b16 %v137, %v133
    %v190 = vpack.c.b16 %v138, %v134
    %v191 = vpack.c.b16 %v143, %v139
    %v192 = vpack.c.b16 %v144, %v140
    %v193 = vpack.c.b16 %v145, %v141
    %v194 = vpack.c.b16 %v146, %v142
    %v195 = vpack.c.b16 %v151, %v147
    %v196 = vpack.c.b16 %v152, %v148
    %v197 = vpack.c.b16 %v153, %v149
    %v198 = vpack.c.b16 %v154, %v150
    %v199 = vpack.c.b16 %v159, %v155
    %v200 = vpack.c.b16 %v160, %v156
    %v201 = vpack.c.b16 %v161, %v157
    %v202 = vpack.c.b16 %v162, %v158
    %v203 = vpack.c.b16 %v167, %v163
    %v204 = vpack.c.b16 %v168, %v164
    %v205 = vpack.c.b16 %v169, %v165
    %v206 = vpack.c.b16 %v170, %v166
    %v207 = vpack.c.b16 %v175, %v171
    %v208 = vpack.c.b16 %v176, %v172
    %v209 = vpack.c.b16 %v177, %v173
    %v210 = vpack.c.b16 %v178, %v174
    %243 = vmatprep.subr.bf16.mxu0 %v180
    %244 = vmatpush1.bf16.msra.mxu0 %v179
    %245 = vmatprep.subr.bf16.mxu0 %v184
    %246 = vmatpush1.bf16.msra.mxu0 %v183
    %247 = vmatprep.subr.bf16.mxu0 %v188
    %248 = vmatpush1.bf16.msra.mxu0 %v187
    %249 = vmatprep.subr.bf16.mxu0 %v192
    %250 = vmatpush1.bf16.msra.mxu0 %v191
    %251 = vmatprep.subr.bf16.mxu0 %v196
    %252 = vmatpush1.bf16.msra.mxu0 %v195
    %253 = vmatprep.subr.bf16.mxu0 %v200
    %254 = vmatpush1.bf16.msra.mxu0 %v199
    %255 = vmatprep.subr.bf16.mxu0 %v204
    %256 = vmatpush1.bf16.msra.mxu0 %v203
    %257 = vmatprep.subr.bf16.mxu0 %v208
    %258 = vmatpush1.bf16.msra.mxu0 %v207
    %259 = vmatprep.subr.bf16.mxu0 0
    %260 = vmatpush1.bf16.msra.mxu0 0
    %261 = vmatprep.subr.bf16.mxu0 0
    %262 = vmatpush1.bf16.msra.mxu0 0
    %263 = vmatprep.subr.bf16.mxu0 0
    %264 = vmatpush1.bf16.msra.mxu0 0
    %265 = vmatprep.subr.bf16.mxu0 0
    %266 = vmatpush1.bf16.msra.mxu0 0
    %267 = vmatprep.subr.bf16.mxu0 0
    %268 = vmatpush1.bf16.msra.mxu0 0
    %269 = vmatprep.subr.bf16.mxu0 0
    %270 = vmatpush1.bf16.msra.mxu0 0
    %271 = vmatprep.subr.bf16.mxu0 0
    %272 = vmatpush1.bf16.msra.mxu0 0
    %273 = vmatprep.subr.bf16.mxu0 0
    %274 = vmatpush1.bf16.msra.mxu0 0
    %275 = vmatprep.mubr.bf16.mxu0 0
    %276 = vmatmul.mubr.bf16.gmra.mrb[0].mxu0 %v28
    %v277 = vpop.f32.mrb[0].mxu0
    %v278 = vadd.f32 %v66, %v277
    %v279 = vpop.f32.mrb[0].mxu0
    %v280 = vadd.f32 %v70, %v279
    %v281 = vpop.f32.mrb[0].mxu0
    %v282 = vpop.f32.mrb[0].mxu0
    %283 = vdwg.mxu0
    %284 = vmatprep.subr.bf16.mxu0 %v182
    %285 = vmatpush1.bf16.msra.mxu0 %v181
    %286 = vmatprep.subr.bf16.mxu0 %v186
    %287 = vmatpush1.bf16.msra.mxu0 %v185
    %288 = vmatprep.subr.bf16.mxu0 %v190
    %289 = vmatpush1.bf16.msra.mxu0 %v189
    %290 = vmatprep.subr.bf16.mxu0 %v194
    %291 = vmatpush1.bf16.msra.mxu0 %v193
    %292 = vmatprep.subr.bf16.mxu0 %v198
    %293 = vmatpush1.bf16.msra.mxu0 %v197
    %294 = vmatprep.subr.bf16.mxu0 %v202
    %295 = vmatpush1.bf16.msra.mxu0 %v201
    %296 = vmatprep.subr.bf16.mxu0 %v206
    %297 = vmatpush1.bf16.msra.mxu0 %v205
    %298 = vmatprep.subr.bf16.mxu0 %v210
    %299 = vmatpush1.bf16.msra.mxu0 %v209
    %300 = vmatprep.subr.bf16.mxu0 0
    %301 = vmatpush1.bf16.msra.mxu0 0
    %302 = vmatprep.subr.bf16.mxu0 0
    %303 = vmatpush1.bf16.msra.mxu0 0
    %304 = vmatprep.subr.bf16.mxu0 0
    %305 = vmatpush1.bf16.msra.mxu0 0
    %306 = vmatprep.subr.bf16.mxu0 0
    %307 = vmatpush1.bf16.msra.mxu0 0
    %308 = vmatprep.subr.bf16.mxu0 0
    %309 = vmatpush1.bf16.msra.mxu0 0
    %310 = vmatprep.subr.bf16.mxu0 0
    %311 = vmatpush1.bf16.msra.mxu0 0
    %312 = vmatprep.subr.bf16.mxu0 0
    %313 = vmatpush1.bf16.msra.mxu0 0
    %314 = vmatprep.subr.bf16.mxu0 0
    %315 = vmatpush1.bf16.msra.mxu0 0
    %316 = vmatprep.mubr.bf16.mxu0 0
    %317 = vmatmul.mubr.bf16.gmra.mrb[0].mxu0 %v28
    %v318 = vpop.f32.mrb[0].mxu0
    %v319 = vadd.f32 %v74, %v318
    %v320 = vpop.f32.mrb[0].mxu0
    %v321 = vadd.f32 %v78, %v320
    %v322 = vpop.f32.mrb[0].mxu0
    %v323 = vpop.f32.mrb[0].mxu0
    %324 = vdwg.mxu0
    %v325 = vmax.f32 %v278, 0.0
    %v326 = vmax.f32 %v280, 0.0
    %v327 = vmax.f32 %v319, 0.0
    %v328 = vmax.f32 %v321, 0.0
    %v329 = vpack.c.bf16 %v325, %v325
    %v330 = vpack.c.bf16 %v326, %v326
    %v331 = vpack.c.bf16 %v327, %v327
    %v332 = vpack.c.bf16 %v328, %v328
    %v333 = vld [vmem:[%s3] sm:$0xf]
    %v334 = vld [vmem:[%s3 + $0x4] sm:$0xf]
    %v335 = vld [vmem:[%s3 + $0x8] sm:$0xf]
    %v336 = vld [vmem:[%s3 + $0xc] sm:$0xf]
    %v337 = vld [vmem:[%s3 + $0x10] sm:$0xf]
    %v338 = vld [vmem:[%s3 + $0x14] sm:$0xf]
    %v339 = vld [vmem:[%s3 + $0x18] sm:$0xf]
    %v340 = vld [vmem:[%s3 + $0x1c] sm:$0xf]
    %v341 = vld [vmem:[%s3 + $0x20] sm:$0xf]
    %v342 = vld [vmem:[%s3 + $0x24] sm:$0xf]
    %v343 = vld [vmem:[%s3 + $0x28] sm:$0xf]
    %v344 = vld [vmem:[%s3 + $0x2c] sm:$0xf]
    %v345 = vld [vmem:[%s3 + $0x30] sm:$0xf]
    %v346 = vld [vmem:[%s3 + $0x34] sm:$0xf]
    %v347 = vld [vmem:[%s3 + $0x38] sm:$0xf]
    %v348 = vld [vmem:[%s3 + $0x3c] sm:$0xf]
    %v349 = vld [vmem:[%s3 + $0x40] sm:$0xf]
    %v350 = vld [vmem:[%s3 + $0x44] sm:$0xf]
    %v351 = vld [vmem:[%s3 + $0x48] sm:$0xf]
    %v352 = vld [vmem:[%s3 + $0x4c] sm:$0xf]
    %v353 = vld [vmem:[%s3 + $0x50] sm:$0xf]
    %v354 = vld [vmem:[%s3 + $0x54] sm:$0xf]
    %v355 = vld [vmem:[%s3 + $0x58] sm:$0xf]
    %v356 = vld [vmem:[%s3 + $0x5c] sm:$0xf]
    %v357 = vld [vmem:[%s3 + $0x60] sm:$0xf]
    %v358 = vld [vmem:[%s3 + $0x64] sm:$0xf]
    %v359 = vld [vmem:[%s3 + $0x68] sm:$0xf]
    %v360 = vld [vmem:[%s3 + $0x6c] sm:$0xf]
    %v361 = vld [vmem:[%s3 + $0x70] sm:$0xf]
    %v362 = vld [vmem:[%s3 + $0x74] sm:$0xf]
    %v363 = vld [vmem:[%s3 + $0x78] sm:$0xf]
    %v364 = vld [vmem:[%s3 + $0x7c] sm:$0xf]
    %v365 = vld [vmem:[%s3 + $0x80] sm:$0xf]
    %v366 = vld [vmem:[%s3 + $0x84] sm:$0xf]
    %v367 = vld [vmem:[%s3 + $0x88] sm:$0xf]
    %v368 = vld [vmem:[%s3 + $0x8c] sm:$0xf]
    %v369 = vld [vmem:[%s3 + $0x90] sm:$0xf]
    %v370 = vld [vmem:[%s3 + $0x94] sm:$0xf]
    %v371 = vld [vmem:[%s3 + $0x98] sm:$0xf]
    %v372 = vld [vmem:[%s3 + $0x9c] sm:$0xf]
    %v373 = vld [vmem:[%s3 + $0xa0] sm:$0xf]
    %v374 = vld [vmem:[%s3 + $0xa4] sm:$0xf]
    %v375 = vld [vmem:[%s3 + $0xa8] sm:$0xf]
    %v376 = vld [vmem:[%s3 + $0xac] sm:$0xf]
    %v377 = vld [vmem:[%s3 + $0xb0] sm:$0xf]
    %v378 = vld [vmem:[%s3 + $0xb4] sm:$0xf]
    %v379 = vld [vmem:[%s3 + $0xb8] sm:$0xf]
    %v380 = vld [vmem:[%s3 + $0xbc] sm:$0xf]
    %v381 = vld [vmem:[%s3 + $0xc0] sm:$0xf]
    %v382 = vld [vmem:[%s3 + $0xc4] sm:$0xf]
    %v383 = vld [vmem:[%s3 + $0xc8] sm:$0xf]
    %v384 = vld [vmem:[%s3 + $0xcc] sm:$0xf]
    %v385 = vld [vmem:[%s3 + $0xd0] sm:$0xf]
    %v386 = vld [vmem:[%s3 + $0xd4] sm:$0xf]
    %v387 = vld [vmem:[%s3 + $0xd8] sm:$0xf]
    %v388 = vld [vmem:[%s3 + $0xdc] sm:$0xf]
    %v389 = vld [vmem:[%s3 + $0xe0] sm:$0xf]
    %v390 = vld [vmem:[%s3 + $0xe4] sm:$0xf]
    %v391 = vld [vmem:[%s3 + $0xe8] sm:$0xf]
    %v392 = vld [vmem:[%s3 + $0xec] sm:$0xf]
    %v393 = vld [vmem:[%s3 + $0xf0] sm:$0xf]
    %v394 = vld [vmem:[%s3 + $0xf4] sm:$0xf]
    %v395 = vld [vmem:[%s3 + $0xf8] sm:$0xf]
    %v396 = vld [vmem:[%s3 + $0xfc] sm:$0xf]
    %v397 = vld [vmem:[%s4] sm:$0x1]
    %v399 = vlaneseq
    %v400 = vshrl.u32 %v399, 7
    %v401 = vsub.s32 0, %v400
    %v402 = vrot.slane %v397, %v401
    %v468 = vunpack.c.l.b16 %v333
    %v469 = vunpack.c.l.b16 %v334
    %v470 = vunpack.c.l.b16 %v335
    %v471 = vunpack.c.l.b16 %v336
    %v472 = vunpack.c.l.b16 %v337
    %v473 = vunpack.c.l.b16 %v338
    %v474 = vunpack.c.l.b16 %v339
    %v475 = vunpack.c.l.b16 %v340
    %v476 = vunpack.c.l.b16 %v341
    %v477 = vunpack.c.l.b16 %v342
    %v478 = vunpack.c.l.b16 %v343
    %v479 = vunpack.c.l.b16 %v344
    %v480 = vunpack.c.l.b16 %v345
    %v481 = vunpack.c.l.b16 %v346
    %v482 = vunpack.c.l.b16 %v347
    %v483 = vunpack.c.l.b16 %v348
    %v484 = vunpack.c.l.b16 %v349
    %v485 = vunpack.c.l.b16 %v350
    %v486 = vunpack.c.l.b16 %v351
    %v487 = vunpack.c.l.b16 %v352
    %v488 = vunpack.c.l.b16 %v353
    %v489 = vunpack.c.l.b16 %v354
    %v490 = vunpack.c.l.b16 %v355
    %v491 = vunpack.c.l.b16 %v356
    %v492 = vunpack.c.l.b16 %v357
    %v493 = vunpack.c.l.b16 %v358
    %v494 = vunpack.c.l.b16 %v359
    %v495 = vunpack.c.l.b16 %v360
    %v496 = vunpack.c.l.b16 %v361
    %v497 = vunpack.c.l.b16 %v362
    %v498 = vunpack.c.l.b16 %v363
    %v499 = vunpack.c.l.b16 %v364
    %v500 = vunpack.c.l.b16 %v365
    %v501 = vunpack.c.l.b16 %v366
    %v502 = vunpack.c.l.b16 %v367
    %v503 = vunpack.c.l.b16 %v368
    %v504 = vunpack.c.l.b16 %v369
    %v505 = vunpack.c.l.b16 %v370
    %v506 = vunpack.c.l.b16 %v371
    %v507 = vunpack.c.l.b16 %v372
    %v508 = vunpack.c.l.b16 %v373
    %v509 = vunpack.c.l.b16 %v374
    %v510 = vunpack.c.l.b16 %v375
    %v511 = vunpack.c.l.b16 %v376
    %v512 = vunpack.c.l.b16 %v377
    %v513 = vunpack.c.l.b16 %v378
    %v514 = vunpack.c.l.b16 %v379
    %v515 = vunpack.c.l.b16 %v380
    %v516 = vunpack.c.l.b16 %v381
    %v517 = vunpack.c.l.b16 %v382
    %v518 = vunpack.c.l.b16 %v383
    %v519 = vunpack.c.l.b16 %v384
    %v520 = vunpack.c.l.b16 %v385
    %v521 = vunpack.c.l.b16 %v386
    %v522 = vunpack.c.l.b16 %v387
    %v523 = vunpack.c.l.b16 %v388
    %v524 = vunpack.c.l.b16 %v389
    %v525 = vunpack.c.l.b16 %v390
    %v526 = vunpack.c.l.b16 %v391
    %v527 = vunpack.c.l.b16 %v392
    %v528 = vunpack.c.l.b16 %v393
    %v529 = vunpack.c.l.b16 %v394
    %v530 = vunpack.c.l.b16 %v395
    %v531 = vunpack.c.l.b16 %v396
    %v532 = vpack.c.b16 %v469, %v468
    %v533 = vpack.c.b16 %v471, %v470
    %v534 = vpack.c.b16 %v473, %v472
    %v535 = vpack.c.b16 %v475, %v474
    %v536 = vpack.c.b16 %v477, %v476
    %v537 = vpack.c.b16 %v479, %v478
    %v538 = vpack.c.b16 %v481, %v480
    %v539 = vpack.c.b16 %v483, %v482
    %v540 = vpack.c.b16 %v485, %v484
    %v541 = vpack.c.b16 %v487, %v486
    %v542 = vpack.c.b16 %v489, %v488
    %v543 = vpack.c.b16 %v491, %v490
    %v544 = vpack.c.b16 %v493, %v492
    %v545 = vpack.c.b16 %v495, %v494
    %v546 = vpack.c.b16 %v497, %v496
    %v547 = vpack.c.b16 %v499, %v498
    %v548 = vpack.c.b16 %v501, %v500
    %v549 = vpack.c.b16 %v503, %v502
    %v550 = vpack.c.b16 %v505, %v504
    %v551 = vpack.c.b16 %v507, %v506
    %v552 = vpack.c.b16 %v509, %v508
    %v553 = vpack.c.b16 %v511, %v510
    %v554 = vpack.c.b16 %v513, %v512
    %v555 = vpack.c.b16 %v515, %v514
    %v556 = vpack.c.b16 %v517, %v516
    %v557 = vpack.c.b16 %v519, %v518
    %v558 = vpack.c.b16 %v521, %v520
    %v559 = vpack.c.b16 %v523, %v522
    %v560 = vpack.c.b16 %v525, %v524
    %v561 = vpack.c.b16 %v527, %v526
    %v562 = vpack.c.b16 %v529, %v528
    %v563 = vpack.c.b16 %v531, %v530
    %596 = vmatprep.subr.bf16.mxu0 0
    %597 = vmatpush1.bf16.msra.mxu0 %v532
    %598 = vmatprep.subr.bf16.mxu0 0
    %599 = vmatpush1.bf16.msra.mxu0 %v533
    %600 = vmatprep.subr.bf16.mxu0 0
    %601 = vmatpush1.bf16.msra.mxu0 %v534
    %602 = vmatprep.subr.bf16.mxu0 0
    %603 = vmatpush1.bf16.msra.mxu0 %v535
    %604 = vmatprep.subr.bf16.mxu0 0
    %605 = vmatpush1.bf16.msra.mxu0 %v536
    %606 = vmatprep.subr.bf16.mxu0 0
    %607 = vmatpush1.bf16.msra.mxu0 %v537
    %608 = vmatprep.subr.bf16.mxu0 0
    %609 = vmatpush1.bf16.msra.mxu0 %v538
    %610 = vmatprep.subr.bf16.mxu0 0
    %611 = vmatpush1.bf16.msra.mxu0 %v539
    %612 = vmatprep.subr.bf16.mxu0 0
    %613 = vmatpush1.bf16.msra.mxu0 %v540
    %614 = vmatprep.subr.bf16.mxu0 0
    %615 = vmatpush1.bf16.msra.mxu0 %v541
    %616 = vmatprep.subr.bf16.mxu0 0
    %617 = vmatpush1.bf16.msra.mxu0 %v542
    %618 = vmatprep.subr.bf16.mxu0 0
    %619 = vmatpush1.bf16.msra.mxu0 %v543
    %620 = vmatprep.subr.bf16.mxu0 0
    %621 = vmatpush1.bf16.msra.mxu0 %v544
    %622 = vmatprep.subr.bf16.mxu0 0
    %623 = vmatpush1.bf16.msra.mxu0 %v545
    %624 = vmatprep.subr.bf16.mxu0 0
    %625 = vmatpush1.bf16.msra.mxu0 %v546
    %626 = vmatprep.subr.bf16.mxu0 0
    %627 = vmatpush1.bf16.msra.mxu0 %v547
    %628 = vmatprep.mubr.bf16.mxu0 %v330
    %629 = vmatmul.mubr.bf16.gmra.mrb[0].mxu0 %v329
    %v630 = vpop.f32.mrb[0].mxu0
    %v631 = vadd.f32 %v402, %v630
    %v632 = vpop.f32.mrb[0].mxu0
    %v633 = vpop.f32.mrb[0].mxu0
    %v634 = vpop.f32.mrb[0].mxu0
    %635 = vdwg.mxu0
    %636 = vmatprep.subr.bf16.mxu0 0
    %637 = vmatpush1.bf16.msra.mxu0 %v548
    %638 = vmatprep.subr.bf16.mxu0 0
    %639 = vmatpush1.bf16.msra.mxu0 %v549
    %640 = vmatprep.subr.bf16.mxu0 0
    %641 = vmatpush1.bf16.msra.mxu0 %v550
    %642 = vmatprep.subr.bf16.mxu0 0
    %643 = vmatpush1.bf16.msra.mxu0 %v551
    %644 = vmatprep.subr.bf16.mxu0 0
    %645 = vmatpush1.bf16.msra.mxu0 %v552
    %646 = vmatprep.subr.bf16.mxu0 0
    %647 = vmatpush1.bf16.msra.mxu0 %v553
    %648 = vmatprep.subr.bf16.mxu0 0
    %649 = vmatpush1.bf16.msra.mxu0 %v554
    %650 = vmatprep.subr.bf16.mxu0 0
    %651 = vmatpush1.bf16.msra.mxu0 %v555
    %652 = vmatprep.subr.bf16.mxu0 0
    %653 = vmatpush1.bf16.msra.mxu0 %v556
    %654 = vmatprep.subr.bf16.mxu0 0
    %655 = vmatpush1.bf16.msra.mxu0 %v557
    %656 = vmatprep.subr.bf16.mxu0 0
    %657 = vmatpush1.bf16.msra.mxu0 %v558
    %658 = vmatprep.subr.bf16.mxu0 0
    %659 = vmatpush1.bf16.msra.mxu0 %v559
    %660 = vmatprep.subr.bf16.mxu0 0
    %661 = vmatpush1.bf16.msra.mxu0 %v560
    %662 = vmatprep.subr.bf16.mxu0 0
    %663 = vmatpush1.bf16.msra.mxu0 %v561
    %664 = vmatprep.subr.bf16.mxu0 0
    %665 = vmatpush1.bf16.msra.mxu0 %v562
    %666 = vmatprep.subr.bf16.mxu0 0
    %667 = vmatpush1.bf16.msra.mxu0 %v563
    %668 = vmatprep.mubr.bf16.mxu0 %v332
    %669 = vmatmul.mubr.bf16.gmra.mrb[0].mxu0 %v331
    %v670 = vpop.f32.mrb[0].mxu0
    %v671 = vadd.f32 %v631, %v670
    %v672 = vpop.f32.mrb[0].mxu0
    %v673 = vpop.f32.mrb[0].mxu0
    %v674 = vpop.f32.mrb[0].mxu0
    %675 = vdwg.mxu0
    %v676 = vmax.f32 %v671, 0.0
    %v677 = vpack.c.bf16 %v676, %v676
    %v678 = vld [vmem:[%s5] sm:$0xf]
    %v679 = vld [vmem:[%s5 + $0x4] sm:$0xf]
    %v680 = vld [vmem:[%s5 + $0x8] sm:$0xf]
    %v681 = vld [vmem:[%s5 + $0xc] sm:$0xf]
    %v682 = vld [vmem:[%s5 + $0x10] sm:$0xf]
    %v683 = vld [vmem:[%s5 + $0x14] sm:$0xf]
    %v684 = vld [vmem:[%s5 + $0x18] sm:$0xf]
    %v685 = vld [vmem:[%s5 + $0x1c] sm:$0xf]
    %v686 = vld [vmem:[%s5 + $0x20] sm:$0xf]
    %v687 = vld [vmem:[%s5 + $0x24] sm:$0xf]
    %v688 = vld [vmem:[%s5 + $0x28] sm:$0xf]
    %v689 = vld [vmem:[%s5 + $0x2c] sm:$0xf]
    %v690 = vld [vmem:[%s5 + $0x30] sm:$0xf]
    %v691 = vld [vmem:[%s5 + $0x34] sm:$0xf]
    %v692 = vld [vmem:[%s5 + $0x38] sm:$0xf]
    %v693 = vld [vmem:[%s5 + $0x3c] sm:$0xf]
    %v694 = vld [vmem:[%s6] sm:$0x1]
    %v696 = vlaneseq
    %v697 = vshrl.u32 %v696, 7
    %v698 = vsub.s32 0, %v697
    %v699 = vrot.slane %v694, %v698
    %v717 = vunpack.c.l.b16 %v678
    %v718 = vunpack.c.l.b16 %v679
    %v719 = vunpack.c.l.b16 %v680
    %v720 = vunpack.c.l.b16 %v681
    %v721 = vunpack.c.l.b16 %v682
    %v722 = vunpack.c.l.b16 %v683
    %v723 = vunpack.c.l.b16 %v684
    %v724 = vunpack.c.l.b16 %v685
    %v725 = vunpack.c.l.b16 %v686
    %v726 = vunpack.c.l.b16 %v687
    %v727 = vunpack.c.l.b16 %v688
    %v728 = vunpack.c.l.b16 %v689
    %v729 = vunpack.c.l.b16 %v690
    %v730 = vunpack.c.l.b16 %v691
    %v731 = vunpack.c.l.b16 %v692
    %v732 = vunpack.c.l.b16 %v693
    %v733 = vpack.c.b16 %v718, %v717
    %v734 = vpack.c.b16 %v720, %v719
    %v735 = vpack.c.b16 %v722, %v721
    %v736 = vpack.c.b16 %v724, %v723
    %v737 = vpack.c.b16 %v726, %v725
    %v738 = vpack.c.b16 %v728, %v727
    %v739 = vpack.c.b16 %v730, %v729
    %v740 = vpack.c.b16 %v732, %v731
    %749 = vmatprep.subr.bf16.mxu0 0
    %750 = vmatpush1.bf16.msra.mxu0 %v733
    %751 = vmatprep.subr.bf16.mxu0 0
    %752 = vmatpush1.bf16.msra.mxu0 %v734
    %753 = vmatprep.subr.bf16.mxu0 0
    %754 = vmatpush1.bf16.msra.mxu0 %v735
    %755 = vmatprep.subr.bf16.mxu0 0
    %756 = vmatpush1.bf16.msra.mxu0 %v736
    %757 = vmatprep.subr.bf16.mxu0 0
    %758 = vmatpush1.bf16.msra.mxu0 %v737
    %759 = vmatprep.subr.bf16.mxu0 0
    %760 = vmatpush1.bf16.msra.mxu0 %v738
    %761 = vmatprep.subr.bf16.mxu0 0
    %762 = vmatpush1.bf16.msra.mxu0 %v739
    %763 = vmatprep.subr.bf16.mxu0 0
    %764 = vmatpush1.bf16.msra.mxu0 %v740
    %765 = vmatprep.subr.bf16.mxu0 0
    %766 = vmatpush1.bf16.msra.mxu0 0
    %767 = vmatprep.subr.bf16.mxu0 0
    %768 = vmatpush1.bf16.msra.mxu0 0
    %769 = vmatprep.subr.bf16.mxu0 0
    %770 = vmatpush1.bf16.msra.mxu0 0
    %771 = vmatprep.subr.bf16.mxu0 0
    %772 = vmatpush1.bf16.msra.mxu0 0
    %773 = vmatprep.subr.bf16.mxu0 0
    %774 = vmatpush1.bf16.msra.mxu0 0
    %775 = vmatprep.subr.bf16.mxu0 0
    %776 = vmatpush1.bf16.msra.mxu0 0
    %777 = vmatprep.subr.bf16.mxu0 0
    %778 = vmatpush1.bf16.msra.mxu0 0
    %779 = vmatprep.subr.bf16.mxu0 0
    %780 = vmatpush1.bf16.msra.mxu0 0
    %781 = vmatprep.mubr.bf16.mxu0 0
    %782 = vmatmul.mubr.bf16.gmra.mrb[0].mxu0 %v677
    %v783 = vpop.f32.mrb[0].mxu0
    %v784 = vadd.f32 %v699, %v783
    %v785 = vpop.f32.mrb[0].mxu0
    %v786 = vpop.f32.mrb[0].mxu0
    %v787 = vpop.f32.mrb[0].mxu0
    %788 = vdwg.mxu0
    %789 = vmax.xlane.f32.xlu0 %v784
    %v790 = vpop.xlane.xlu0 %789
    %v791 = vsub.f32 %v784, %v790
    %v792 = vmul.f32 %v791, 1.442695
    %v793 = vpow.pop %v792
    %794 = vadd.xlane.f32.xlu0 %v793
    %v795 = vpop.xlane.xlu0 %794
    %v796 = vlog2.pop %v795
    %v797 = vmul.f32 %v796, 0.6931472
    %v798 = vsub.f32 %v791, %v797
    %799 = vst [vmem:[#allocation2] sm:$0xff] %v798
    // Predicated region
    $region30: #{mlp_forward.1} parent=1 // pred_check
      _
    $region31: #{mlp_forward.1} parent=1 // pred_check_branch
      %801 = sbr.rel (0) target = $region33
    $region32: #{mlp_forward.1} parent=1 // pred_region
      %s803 = ssub.s32 128, 128
      %804 = vsyncadd [#allocation3], %s803
      %s806 = sshll.u32 [#allocation2], 4
      %s807 = int_to_ptr.vmem [resolvable:$true] %s806
      %809 = dma.vmem_to_hbm [thread:$0]  %s807, 128, %s7, [#allocation3]
    $region33: #{mlp_forward.1} parent=1 // pred_fallthru
      _
    // Predicated region
    $region34: #{mlp_forward.1} parent=1 // pred_check
      _
    $region35: #{mlp_forward.1} parent=1 // pred_check_branch
      %811 = sbr.rel (0) target = $region37
    $region36: #{mlp_forward.1} parent=1 // pred_region
      %812 = dma.done [#allocation3], 128
    $region37: #{mlp_forward.1} parent=1 // pred_fallthru
      _
    %813 = vsyncpa [#allocation3], 1

</llo_original>
